<compile_context>
chip_gen: v5e
topology: v5e:2x2
jax: 0.10.0
libtpu: 0.0.40
codegen_flags: <defaults>
</compile_context>

<pallas_src>
import jax
import jax.numpy as jnp
from jax.experimental import pallas as pl
from jax.experimental.pallas import tpu as pltpu

D_IN = 28 * 28      # 784 contraction dim (unpadded; 8-divisible)
H = 64
H_PAD = 128         # hidden padded to one MXU/lane tile
O = 3
O_PAD = 128         # output padded to lane-dense 128 (unmasked stores)
TB_DEFAULT = 512    # default batch tile (multiple of 128), sweepable
TB_MAX = 1024       # keep double-buffered VMEM well under the 32 MiB default


def encoder_kernel(x_ref, w1_ref, b1_ref, w2_ref, b2_ref, o_ref):
    # Streamed f32 activations -> bf16 in VMEM (cheap VPU cast), MXU-native
    # bf16 matmul with f32 accumulation.
    x = x_ref[...].astype(jnp.bfloat16)
    h = jnp.dot(x, w1_ref[...], preferred_element_type=jnp.float32)
    h = jnp.maximum(h + b1_ref[...], 0.0)                        # bias + ReLU (VPU)
    out = jnp.dot(h.astype(jnp.bfloat16), w2_ref[...],
                  preferred_element_type=jnp.float32)
    o_ref[...] = (out + b2_ref[...]).astype(o_ref.dtype)         # lane-dense store


def prepare_params(w1, b1, w2, b2):
    """Pad + cast parameters once at load time (zero padding keeps math exact).

    Weights are stored pre-transposed as (in_features, out_features) so the
    kernel computes x @ W + b (== PyTorch's x @ W.T + b)."""
    w1p = jnp.zeros((D_IN, H_PAD), jnp.float32).at[:, :H].set(w1)
    b1p = jnp.zeros((1, H_PAD), jnp.float32).at[0, :H].set(b1)
    w2p = jnp.zeros((H_PAD, O_PAD), jnp.float32).at[:H, :O].set(w2)
    b2p = jnp.zeros((1, O_PAD), jnp.float32).at[0, :O].set(b2)
    return (w1p.astype(jnp.bfloat16), b1p,
            w2p.astype(jnp.bfloat16), b2p)


def _pick_tile(batch, tb):
    """Multiple-of-128 batch tile, capped, with >=2 grid steps when possible
    so both v7x TensorCores get work (no-op on single-TC v5e/v6e)."""
    if batch <= 128:
        return batch                       # one block == full batch dim (legal)
    tb = max(128, (min(tb, TB_MAX) // 128) * 128)
    half = max(128, (batch // 2) // 128 * 128)
    return min(tb, half)


def encoder_forward(x, params, *, tb=TB_DEFAULT, out_dtype=jnp.bfloat16):
    """x: (B, 784) f32. Returns (B, 3) in `out_dtype` (bf16 by default)."""
    w1p, b1p, w2p, b2p = params
    B = x.shape[0]
    tb = _pick_tile(B, tb)
    n_tiles = pl.cdiv(B, tb)

    out = pl.pallas_call(
        encoder_kernel,
        out_shape=jax.ShapeDtypeStruct((B, O_PAD), out_dtype),
        grid=(n_tiles,),
        in_specs=[
            pl.BlockSpec((tb, D_IN), lambda i: (i, 0)),      # x: f32, streamed per tile
            pl.BlockSpec((D_IN, H_PAD), lambda i: (0, 0)),   # W1: bf16, VMEM-resident
            pl.BlockSpec((1, H_PAD), lambda i: (0, 0)),      # b1: f32, VMEM-resident
            pl.BlockSpec((H_PAD, O_PAD), lambda i: (0, 0)),  # W2: bf16, VMEM-resident
            pl.BlockSpec((1, O_PAD), lambda i: (0, 0)),      # b2: f32, VMEM-resident
        ],
        out_specs=pl.BlockSpec((tb, O_PAD), lambda i: (i, 0)),
        compiler_params=pltpu.CompilerParams(
            dimension_semantics=("parallel",)),   # shard batch tiles across TCs (v7x)
    )(x, w1p, b1p, w2p, b2p)

    return out[:, :O]


def init_params(key):
    """Mimics nn.Linear's default U(-1/sqrt(fan_in), +1/sqrt(fan_in)) init."""
    k1, k2, k3, k4 = jax.random.split(key, 4)
    bound1 = 1.0 / jnp.sqrt(D_IN)
    bound2 = 1.0 / jnp.sqrt(H)
    w1 = jax.random.uniform(k1, (D_IN, H), jnp.float32, -bound1, bound1)
    b1 = jax.random.uniform(k2, (H,), jnp.float32, -bound1, bound1)
    w2 = jax.random.uniform(k3, (H, O), jnp.float32, -bound2, bound2)
    b2 = jax.random.uniform(k4, (O,), jnp.float32, -bound2, bound2)
    return w1, b1, w2, b2


if __name__ == "__main__":
    key = jax.random.PRNGKey(0)
    pkey, xkey = jax.random.split(key)
    w1, b1, w2, b2 = init_params(pkey)
    params = prepare_params(w1, b1, w2, b2)

    # Flattened 28x28 images -> (B, 784); tile picker gives 2 x 128-row tiles
    # here (keeps both v7x TensorCores busy); larger batches use 512-row tiles.
    B = 256
    x = jax.random.normal(xkey, (B, D_IN), jnp.float32)

    out = encoder_forward(x, params)
    out = jax.block_until_ready(out)

    # Pure-JAX reference following the same bf16-input / f32-accumulate path.
    xb = x.astype(jnp.bfloat16)
    w1b = w1.astype(jnp.bfloat16)
    w2b = w2.astype(jnp.bfloat16)
    h = jnp.maximum(
        jnp.dot(xb, w1b, preferred_element_type=jnp.float32) + b1, 0.0)
    ref = jnp.dot(h.astype(jnp.bfloat16), w2b,
                  preferred_element_type=jnp.float32) + b2

    assert out.shape == (B, O)
    # Output is stored in bf16 (perf): allow bf16 rounding of the final result.
    assert jnp.allclose(out.astype(jnp.float32), ref, atol=2e-2, rtol=2e-2)

    print("KERNEL_OK")
</pallas_src>

<mosaic_0001>
module attributes {stable_mosaic.version = 11 : i64} {
  func.func @encoder_kernel(%arg0: i32, %arg1: memref<128x784xf32, #tpu.memory_space<vmem>>, %arg2: memref<784x128xbf16, #tpu.memory_space<vmem>>, %arg3: memref<1x128xf32, #tpu.memory_space<vmem>>, %arg4: memref<128x128xbf16, #tpu.memory_space<vmem>>, %arg5: memref<1x128xf32, #tpu.memory_space<vmem>>, %arg6: memref<128x128xbf16, #tpu.memory_space<vmem>>) attributes {dimension_semantics = [#tpu.dimension_semantics<parallel>], iteration_bounds = array<i64: 2>, scalar_prefetch = 0 : i64, scratch_operands = 0 : i64, tpu.core_type = #tpu.core_type<tc>, window_params = [{transform_indices = @transform_0, window_bounds = array<i64: 128, 784>}, {pipeline_mode = #tpu.pipeline_mode<synchronous>, transform_indices = @transform_1, window_bounds = array<i64: 784, 128>}, {pipeline_mode = #tpu.pipeline_mode<synchronous>, transform_indices = @transform_2, window_bounds = array<i64: 1, 128>}, {pipeline_mode = #tpu.pipeline_mode<synchronous>, transform_indices = @transform_3, window_bounds = array<i64: 128, 128>}, {pipeline_mode = #tpu.pipeline_mode<synchronous>, transform_indices = @transform_4, window_bounds = array<i64: 1, 128>}, {transform_indices = @transform_5, window_bounds = array<i64: 128, 128>}]} {
    %c0 = arith.constant 0 : index
    %c0_0 = arith.constant 0 : index
    %0 = vector.load %arg1[%c0, %c0_0] : memref<128x784xf32, #tpu.memory_space<vmem>>, vector<128x784xf32>
    %1 = arith.truncf %0 : vector<128x784xf32> to vector<128x784xbf16>
    %c0_1 = arith.constant 0 : index
    %c0_2 = arith.constant 0 : index
    %2 = vector.load %arg2[%c0_1, %c0_2] : memref<784x128xbf16, #tpu.memory_space<vmem>>, vector<784x128xbf16>
    %cst = arith.constant dense<0.000000e+00> : vector<128x128xf32>
    %3 = tpu.matmul %1, %2, %cst {dimension_numbers = #tpu.dot_dimension_numbers<[1], [0], [0], [1], [0, 0, 1, 1], [], []>} : vector<128x784xbf16>, vector<784x128xbf16>, vector<128x128xf32> -> vector<128x128xf32>
    %c0_3 = arith.constant 0 : index
    %c0_4 = arith.constant 0 : index
    %4 = vector.load %arg3[%c0_3, %c0_4] : memref<1x128xf32, #tpu.memory_space<vmem>>, vector<1x128xf32>
    %5 = vector.broadcast %4 : vector<1x128xf32> to vector<128x128xf32>
    %6 = arith.addf %3, %5 : vector<128x128xf32>
    %cst_5 = arith.constant 0.000000e+00 : f32
    %7 = vector.broadcast %cst_5 : f32 to vector<128x128xf32>
    %8 = arith.maximumf %6, %7 : vector<128x128xf32>
    %9 = arith.truncf %8 : vector<128x128xf32> to vector<128x128xbf16>
    %c0_6 = arith.constant 0 : index
    %c0_7 = arith.constant 0 : index
    %10 = vector.load %arg4[%c0_6, %c0_7] : memref<128x128xbf16, #tpu.memory_space<vmem>>, vector<128x128xbf16>
    %cst_8 = arith.constant dense<0.000000e+00> : vector<128x128xf32>
    %11 = tpu.matmul %9, %10, %cst_8 {dimension_numbers = #tpu.dot_dimension_numbers<[1], [0], [0], [1], [0, 0, 1, 1], [], []>} : vector<128x128xbf16>, vector<128x128xbf16>, vector<128x128xf32> -> vector<128x128xf32>
    %c0_9 = arith.constant 0 : index
    %c0_10 = arith.constant 0 : index
    %12 = vector.load %arg5[%c0_9, %c0_10] : memref<1x128xf32, #tpu.memory_space<vmem>>, vector<1x128xf32>
    %13 = vector.broadcast %12 : vector<1x128xf32> to vector<128x128xf32>
    %14 = arith.addf %11, %13 : vector<128x128xf32>
    %15 = arith.truncf %14 : vector<128x128xf32> to vector<128x128xbf16>
    %c0_11 = arith.constant 0 : index
    %c0_12 = arith.constant 0 : index
    %16 = vector.load %arg6[%c0_11, %c0_12] : memref<128x128xbf16, #tpu.memory_space<vmem>>, vector<128x128xbf16>
    tpu.vector_store %arg6[%c0_11, %c0_12], %15 {strides = array<i32>} : memref<128x128xbf16, #tpu.memory_space<vmem>>, vector<128x128xbf16>,
    return
  }
  func.func @transform_0(%arg0: i32) -> (i32, i32) {
    %c0_i32 = arith.constant 0 : i32
    %c0_i32_0 = arith.constant 0 : i32
    return %arg0, %c0_i32 : i32, i32
  }
  func.func @transform_1(%arg0: i32) -> (i32, i32) {
    %c0_i32 = arith.constant 0 : i32
    %c0_i32_0 = arith.constant 0 : i32
    %c0_i32_1 = arith.constant 0 : i32
    return %c0_i32, %c0_i32_0 : i32, i32
  }
  func.func @transform_2(%arg0: i32) -> (i32, i32) {
    %c0_i32 = arith.constant 0 : i32
    %c0_i32_0 = arith.constant 0 : i32
    %c0_i32_1 = arith.constant 0 : i32
    return %c0_i32, %c0_i32_0 : i32, i32
  }
  func.func @transform_3(%arg0: i32) -> (i32, i32) {
    %c0_i32 = arith.constant 0 : i32
    %c0_i32_0 = arith.constant 0 : i32
    %c0_i32_1 = arith.constant 0 : i32
    return %c0_i32, %c0_i32_0 : i32, i32
  }
  func.func @transform_4(%arg0: i32) -> (i32, i32) {
    %c0_i32 = arith.constant 0 : i32
    %c0_i32_0 = arith.constant 0 : i32
    %c0_i32_1 = arith.constant 0 : i32
    return %c0_i32, %c0_i32_0 : i32, i32
  }
  func.func @transform_5(%arg0: i32) -> (i32, i32) {
    %c0_i32 = arith.constant 0 : i32
    %c0_i32_0 = arith.constant 0 : i32
    return %arg0, %c0_i32 : i32, i32
  }
}

</mosaic_0001>

<llo_original>
// kernel: tpu_custom_call.1
$region0: #{tpu_custom_call.1}
  #allocation0 [shape = 'u32[]', space=smem, size = 0x4, offset = 0x4, fixed_abs, tag = 'smem constant byte address 0x4 - core index']
  #allocation1 [shape = 'u32[72,128]{1,0:T(1,128)}', space=vmem, size = 0x9000, scoped, tag = 'internal scratch']
  %s0 = inlined_call_operand.vmem [shape: f32[256,784], index: 0, kind: input, shape index: {}]
  %s1 = inlined_call_operand.vmem [shape: bf16[784,128], index: 1, kind: input, shape index: {}]
  %s2 = inlined_call_operand.vmem [shape: f32[1,128], index: 2, kind: input, shape index: {}]
  %s3 = inlined_call_operand.vmem [shape: bf16[128,128], index: 3, kind: input, shape index: {}]
  %s4 = inlined_call_operand.vmem [shape: f32[1,128], index: 4, kind: input, shape index: {}]
  %s5 = inlined_call_operand.hbm [shape: bf16[256,128], index: 5, kind: output, shape index: {}]
  %s6 = sld [smem:[#allocation0]]
  $region53: #{tpu_custom_call.1} parent=0
    _
  %s8 = ssub.s32 1, %s6
  %s9 = scalar_select 0, %s8, %s6
  $region1: #{tpu_custom_call.1} parent=0
    #allocation2 [shape = 'u8[65536]{0}', space=vmem, size = 0x10000, scoped, tag = 'output window, operand 0']
    #allocation3 [shape = 's32[2]{0}', space=sflag, size = 0x8, scoped, tag = 'scoped memory for tpu_custom_call.1']
    %10 = vsyncpa [#allocation3], 0
    %s11 = scalar_lea.sflag [#allocation3], 1
    %12 = vsyncpa %s11, 0
    loop: start=0, step=1, limit=4
    $region2: #{tpu_custom_call.1} parent=1 // loop_pre_header
      _
    $region3: #{tpu_custom_call.1} parent=1 // loop_header
      %s14 = sphi 0, %s18
      %p15 = scmp.ge.s32.totalorder %s14, 4
      %s24 = sphi 0, %s26
      %s27 = sphi 0, %s24
      %s28 = sphi 0, %s27
      %s44 = sphi 0, %s28
      %s48 = sphi 0, %s48
      %s50 = sphi 0, %s48
      %s51 = sphi 0, %s50
      %s65 = sphi 0, %s51
      %s69 = sphi 0, %s69
      %s71 = sphi 0, %s69
      %s72 = sphi 0, %s71
      %s86 = sphi 0, %s72
      %s90 = sphi 0, %s90
      %s92 = sphi 0, %s90
      %s93 = sphi 0, %s92
      %s107 = sphi 0, %s93
      %s111 = sphi 0, %s111
      %s113 = sphi 0, %s111
      %s114 = sphi 0, %s113
      %s128 = sphi 0, %s114
      %s134 = sphi 0, %s136
      %s137 = sphi 0, %s134
      %s138 = sphi 0, %s137
      %s154 = sphi 0, %s138
    $region4: #{tpu_custom_call.1} parent=1 // loop_header_branch
      %17 = sbr.rel (%p15) target = $region8
    $region5: #{tpu_custom_call.1} parent=1 // loop_body
      %s19 = ssub.s32 %s14, 1
      %s20 = ssub.s32 %s14, 2
      %s21 = sadd.s32 %s14, 1
      %s22 = ssub.s32 %s14, %s21
      %p23 = scmp.eq.s32.totalorder %s22, 0
      %s25 = sadd.s32 %s24, 1
      %s26 = scalar_select %p23, %s24, %s25
      %p29 = pneg %p23
      %p30 = scmp.eq.s32.totalorder %s14, 1
      %p31 = por %p29, %p30
      %p32 = scmp.ne.s32.totalorder %s24, %s27
      %p33 = scmp.eq.s32.totalorder %s14, 0
      %p34 = por %p32, %p33
      %p35 = scmp.ne.s32.totalorder %s24, %s27
      %p36 = scmp.eq.s32.totalorder %s19, 1
      %p37 = por %p35, %p36
      %p38 = scmp.ne.s32.totalorder %s27, %s28
      %p39 = scmp.eq.s32.totalorder %s19, 0
      %p40 = por %p38, %p39
      %p41 = scmp.ne.s32.totalorder %s27, %s28
      %p42 = scmp.eq.s32.totalorder %s20, 1
      %p43 = por %p41, %p42
      %p45 = scmp.ne.s32.totalorder %s28, %s44
      %p46 = scmp.eq.s32.totalorder %s20, 0
      %p47 = por %p45, %p46
      %s49 = sadd.s32 %s48, 1
      %p52 = scmp.eq.s32.totalorder %s14, 1
      %p53 = scmp.ne.s32.totalorder %s48, %s50
      %p54 = scmp.eq.s32.totalorder %s14, 0
      %p55 = por %p53, %p54
      %p56 = scmp.ne.s32.totalorder %s48, %s50
      %p57 = scmp.eq.s32.totalorder %s19, 1
      %p58 = por %p56, %p57
      %p59 = scmp.ne.s32.totalorder %s50, %s51
      %p60 = scmp.eq.s32.totalorder %s19, 0
      %p61 = por %p59, %p60
      %p62 = scmp.ne.s32.totalorder %s50, %s51
      %p63 = scmp.eq.s32.totalorder %s20, 1
      %p64 = por %p62, %p63
      %p66 = scmp.ne.s32.totalorder %s51, %s65
      %p67 = scmp.eq.s32.totalorder %s20, 0
      %p68 = por %p66, %p67
      %s70 = sadd.s32 %s69, 1
      %p73 = scmp.eq.s32.totalorder %s14, 1
      %p74 = scmp.ne.s32.totalorder %s69, %s71
      %p75 = scmp.eq.s32.totalorder %s14, 0
      %p76 = por %p74, %p75
      %p77 = scmp.ne.s32.totalorder %s69, %s71
      %p78 = scmp.eq.s32.totalorder %s19, 1
      %p79 = por %p77, %p78
      %p80 = scmp.ne.s32.totalorder %s71, %s72
      %p81 = scmp.eq.s32.totalorder %s19, 0
      %p82 = por %p80, %p81
      %p83 = scmp.ne.s32.totalorder %s71, %s72
      %p84 = scmp.eq.s32.totalorder %s20, 1
      %p85 = por %p83, %p84
      %p87 = scmp.ne.s32.totalorder %s72, %s86
      %p88 = scmp.eq.s32.totalorder %s20, 0
      %p89 = por %p87, %p88
      %s91 = sadd.s32 %s90, 1
      %p94 = scmp.eq.s32.totalorder %s14, 1
      %p95 = scmp.ne.s32.totalorder %s90, %s92
      %p96 = scmp.eq.s32.totalorder %s14, 0
      %p97 = por %p95, %p96
      %p98 = scmp.ne.s32.totalorder %s90, %s92
      %p99 = scmp.eq.s32.totalorder %s19, 1
      %p100 = por %p98, %p99
      %p101 = scmp.ne.s32.totalorder %s92, %s93
      %p102 = scmp.eq.s32.totalorder %s19, 0
      %p103 = por %p101, %p102
      %p104 = scmp.ne.s32.totalorder %s92, %s93
      %p105 = scmp.eq.s32.totalorder %s20, 1
      %p106 = por %p104, %p105
      %p108 = scmp.ne.s32.totalorder %s93, %s107
      %p109 = scmp.eq.s32.totalorder %s20, 0
      %p110 = por %p108, %p109
      %s112 = sadd.s32 %s111, 1
      %p115 = scmp.eq.s32.totalorder %s14, 1
      %p116 = scmp.ne.s32.totalorder %s111, %s113
      %p117 = scmp.eq.s32.totalorder %s14, 0
      %p118 = por %p116, %p117
      %p119 = scmp.ne.s32.totalorder %s111, %s113
      %p120 = scmp.eq.s32.totalorder %s19, 1
      %p121 = por %p119, %p120
      %p122 = scmp.ne.s32.totalorder %s113, %s114
      %p123 = scmp.eq.s32.totalorder %s19, 0
      %p124 = por %p122, %p123
      %p125 = scmp.ne.s32.totalorder %s113, %s114
      %p126 = scmp.eq.s32.totalorder %s20, 1
      %p127 = por %p125, %p126
      %p129 = scmp.ne.s32.totalorder %s114, %s128
      %p130 = scmp.eq.s32.totalorder %s20, 0
      %p131 = por %p129, %p130
      %s132 = ssub.s32 %s14, %s21
      %p133 = scmp.eq.s32.totalorder %s132, 0
      %s135 = sadd.s32 %s134, 1
      %s136 = scalar_select %p133, %s134, %s135
      %p139 = pneg %p133
      %p140 = scmp.eq.s32.totalorder %s14, 1
      %p141 = por %p139, %p140
      %p142 = scmp.ne.s32.totalorder %s134, %s137
      %p143 = scmp.eq.s32.totalorder %s14, 0
      %p144 = por %p142, %p143
      %p145 = scmp.ne.s32.totalorder %s134, %s137
      %p146 = scmp.eq.s32.totalorder %s19, 1
      %p147 = por %p145, %p146
      %p148 = scmp.ne.s32.totalorder %s137, %s138
      %p149 = scmp.eq.s32.totalorder %s19, 0
      %p150 = por %p148, %p149
      %p151 = scmp.ne.s32.totalorder %s137, %s138
      %p152 = scmp.eq.s32.totalorder %s20, 1
      %p153 = por %p151, %p152
      %p155 = scmp.ne.s32.totalorder %s138, %s154
      %p156 = scmp.eq.s32.totalorder %s20, 0
      %p157 = por %p155, %p156
      %p158 = scmp.le.s32.totalorder 1, %s14
      %p159 = scmp.lt.s32.totalorder %s14, 3
      %p160 = pnand %p158, %p159
      %p161 = pneg %p160
      // Predicated region
      $region9: #{tpu_custom_call.1} parent=5 // pred_check
        _
      $region10: #{tpu_custom_call.1} parent=5 // pred_check_branch
        %163 = sbr.rel (%p160) target = $region12
      $region11: #{tpu_custom_call.1} parent=5 // pred_region
        %s164 = ssub.s32 %s14, 1
        // Predicated region
        $region13: #{tpu_custom_call.1} parent=11 // pred_check
          %p165 = pneg %p61
        $region14: #{tpu_custom_call.1} parent=11 // pred_check_branch
          %167 = sbr.rel (%p165) target = $region16
        $region15: #{tpu_custom_call.1} parent=11 // pred_region
          _
        $region16: #{tpu_custom_call.1} parent=11 // pred_fallthru
          _
        // Predicated region
        $region17: #{tpu_custom_call.1} parent=11 // pred_check
          %p168 = pneg %p82
        $region18: #{tpu_custom_call.1} parent=11 // pred_check_branch
          %170 = sbr.rel (%p168) target = $region20
        $region19: #{tpu_custom_call.1} parent=11 // pred_region
          _
        $region20: #{tpu_custom_call.1} parent=11 // pred_fallthru
          _
        // Predicated region
        $region21: #{tpu_custom_call.1} parent=11 // pred_check
          %p171 = pneg %p103
        $region22: #{tpu_custom_call.1} parent=11 // pred_check_branch
          %173 = sbr.rel (%p171) target = $region24
        $region23: #{tpu_custom_call.1} parent=11 // pred_region
          _
        $region24: #{tpu_custom_call.1} parent=11 // pred_fallthru
          _
        // Predicated region
        $region25: #{tpu_custom_call.1} parent=11 // pred_check
          %p174 = pneg %p124
        $region26: #{tpu_custom_call.1} parent=11 // pred_check_branch
          %176 = sbr.rel (%p174) target = $region28
        $region27: #{tpu_custom_call.1} parent=11 // pred_region
          _
        $region28: #{tpu_custom_call.1} parent=11 // pred_fallthru
          _
      $region12: #{tpu_custom_call.1} parent=5 // pred_fallthru
        _
      %p177 = scmp.lt.s32.totalorder %s14, 2
      // Predicated region
      $region29: #{tpu_custom_call.1} parent=5 // pred_check
        %p178 = pneg %p177
      $region30: #{tpu_custom_call.1} parent=5 // pred_check_branch
        %180 = sbr.rel (%p178) target = $region32
      $region31: #{tpu_custom_call.1} parent=5 // pred_region
        // Predicated region
        $region33: #{tpu_custom_call.1} parent=31 // pred_check
          %p181 = pneg %p34
        $region34: #{tpu_custom_call.1} parent=31 // pred_check_branch
          %183 = sbr.rel (%p181) target = $region36
        $region35: #{tpu_custom_call.1} parent=31 // pred_region
          %s184 = smul.u32 16, %s14
          %p185 = scmp.lt.s32.totalorder %s184, 31
          %s186 = scalar_select %p185, %s184, 31
          %s187 = smul.addr %s186, 7
          %s188 = smul.addr %s187, 8
          %s189 = scalar_lea.vmem %s0, %s188
          %s190 = smul.u32 16, %s14
        $region36: #{tpu_custom_call.1} parent=31 // pred_fallthru
          _
      $region32: #{tpu_custom_call.1} parent=5 // pred_fallthru
        _
      %p191 = scmp.le.s32.totalorder 1, %s14
      %p192 = scmp.lt.s32.totalorder %s14, 3
      %p193 = pnand %p191, %p192
      %p194 = pneg %p193
      // Predicated region
      $region37: #{tpu_custom_call.1} parent=5 // pred_check
        _
      $region38: #{tpu_custom_call.1} parent=5 // pred_check_branch
        %196 = sbr.rel (%p193) target = $region40
      $region39: #{tpu_custom_call.1} parent=5 // pred_region
        %s197 = ssub.s32 %s14, 1
        %s198 = smul.u32 16, %s19
        %p199 = scmp.lt.s32.totalorder %s198, 31
        %s200 = scalar_select %p199, %s198, 31
        %s201 = smul.addr %s200, 7
        %s202 = smul.addr %s201, 8
        %s203 = scalar_lea.vmem %s0, %s202
        %p204 = pneg %p40
        %p205 = pneg %p37
        %p206 = pneg %p61
        %p207 = pneg %p58
        %p208 = pneg %p82
        %p209 = pneg %p79
        %p210 = pneg %p103
        %p211 = pneg %p100
        %p212 = pneg %p124
        %p213 = pneg %p121
        %p214 = pneg %p150
        %p215 = pneg %p147
        %s216 = sand.u32 %s137, 1
        %s217 = scalar_lea.sflag [#allocation3], %s216
        %s218 = sand.u32 %s137, 1
        %s219 = smul.addr %s218, 64
        %s220 = scalar_lea.vmem [#allocation2], %s219
        %s221 = smul.u32 16, %s19
        %p222 = scmp.lt.s32.totalorder %s221, 31
        %s223 = scalar_select %p222, %s221, 31
        %s224 = smul.addr %s223, 7
        %s225 = smul.addr %s224, 8
        %s226 = scalar_lea.vmem %s0, %s225
        %s227 = smul.u32 16, %s19
        %s228 = smul.u32 16, %s19
        %v230 = vld [vmem:[%s226] sm:$0xff]
        %v231 = vld [vmem:[%s226 + $0x8] sm:$0xff]
        %v232 = vld [vmem:[%s226 + $0x10] sm:$0xff]
        %v233 = vld [vmem:[%s226 + $0x18] sm:$0xff]
        %v234 = vld [vmem:[%s226 + $0x20] sm:$0xff]
        %v235 = vld [vmem:[%s226 + $0x28] sm:$0xff]
        %v236 = vld [vmem:[%s226 + $0x30] sm:$0xff]
        %v237 = vld [vmem:[%s226 + $0x38] sm:$0xff]
        %v238 = vld [vmem:[%s226 + $0x40] sm:$0xff]
        %v239 = vld [vmem:[%s226 + $0x48] sm:$0xff]
        %v240 = vld [vmem:[%s226 + $0x50] sm:$0xff]
        %v241 = vld [vmem:[%s226 + $0x58] sm:$0xff]
        %v242 = vld [vmem:[%s226 + $0x60] sm:$0xff]
        %v243 = vld [vmem:[%s226 + $0x68] sm:$0xff]
        %v244 = vld [vmem:[%s226 + $0x70] sm:$0xff]
        %v245 = vld [vmem:[%s226 + $0x78] sm:$0xff]
        %v246 = vld [vmem:[%s226 + $0x80] sm:$0xff]
        %v247 = vld [vmem:[%s226 + $0x88] sm:$0xff]
        %v248 = vld [vmem:[%s226 + $0x90] sm:$0xff]
        %v249 = vld [vmem:[%s226 + $0x98] sm:$0xff]
        %v250 = vld [vmem:[%s226 + $0xa0] sm:$0xff]
        %v251 = vld [vmem:[%s226 + $0xa8] sm:$0xff]
        %v252 = vld [vmem:[%s226 + $0xb0] sm:$0xff]
        %v253 = vld [vmem:[%s226 + $0xb8] sm:$0xff]
        %v254 = vld [vmem:[%s226 + $0xc0] sm:$0xff]
        %v255 = vld [vmem:[%s226 + $0xc8] sm:$0xff]
        %v256 = vld [vmem:[%s226 + $0xd0] sm:$0xff]
        %v257 = vld [vmem:[%s226 + $0xd8] sm:$0xff]
        %v258 = vld [vmem:[%s226 + $0xe0] sm:$0xff]
        %v259 = vld [vmem:[%s226 + $0xe8] sm:$0xff]
        %v260 = vld [vmem:[%s226 + $0xf0] sm:$0xff]
        %v261 = vld [vmem:[%s226 + $0xf8] sm:$0xff]
        %v262 = vld [vmem:[%s226 + $0x100] sm:$0xff]
        %v263 = vld [vmem:[%s226 + $0x108] sm:$0xff]
        %v264 = vld [vmem:[%s226 + $0x110] sm:$0xff]
        %v265 = vld [vmem:[%s226 + $0x118] sm:$0xff]
        %v266 = vld [vmem:[%s226 + $0x120] sm:$0xff]
        %v267 = vld [vmem:[%s226 + $0x128] sm:$0xff]
        %v268 = vld [vmem:[%s226 + $0x130] sm:$0xff]
        %v269 = vld [vmem:[%s226 + $0x138] sm:$0xff]
        %v270 = vld [vmem:[%s226 + $0x140] sm:$0xff]
        %v271 = vld [vmem:[%s226 + $0x148] sm:$0xff]
        %v272 = vld [vmem:[%s226 + $0x150] sm:$0xff]
        %v273 = vld [vmem:[%s226 + $0x158] sm:$0xff]
        %v274 = vld [vmem:[%s226 + $0x160] sm:$0xff]
        %v275 = vld [vmem:[%s226 + $0x168] sm:$0xff]
        %v276 = vld [vmem:[%s226 + $0x170] sm:$0xff]
        %v277 = vld [vmem:[%s226 + $0x178] sm:$0xff]
        %v278 = vld [vmem:[%s226 + $0x180] sm:$0xff]
        %v279 = vld [vmem:[%s226 + $0x188] sm:$0xff]
        %v280 = vld [vmem:[%s226 + $0x190] sm:$0xff]
        %v281 = vld [vmem:[%s226 + $0x198] sm:$0xff]
        %v282 = vld [vmem:[%s226 + $0x1a0] sm:$0xff]
        %v283 = vld [vmem:[%s226 + $0x1a8] sm:$0xff]
        %v284 = vld [vmem:[%s226 + $0x1b0] sm:$0xff]
        %v285 = vld [vmem:[%s226 + $0x1b8] sm:$0xff]
        %v286 = vld [vmem:[%s226 + $0x1c0] sm:$0xff]
        %v287 = vld [vmem:[%s226 + $0x1c8] sm:$0xff]
        %v288 = vld [vmem:[%s226 + $0x1d0] sm:$0xff]
        %v289 = vld [vmem:[%s226 + $0x1d8] sm:$0xff]
        %v290 = vld [vmem:[%s226 + $0x1e0] sm:$0xff]
        %v291 = vld [vmem:[%s226 + $0x1e8] sm:$0xff]
        %v292 = vld [vmem:[%s226 + $0x1f0] sm:$0xff]
        %v293 = vld [vmem:[%s226 + $0x1f8] sm:$0xff]
        %v294 = vld [vmem:[%s226 + $0x200] sm:$0xff]
        %v295 = vld [vmem:[%s226 + $0x208] sm:$0xff]
        %v296 = vld [vmem:[%s226 + $0x210] sm:$0xff]
        %v297 = vld [vmem:[%s226 + $0x218] sm:$0xff]
        %v298 = vld [vmem:[%s226 + $0x220] sm:$0xff]
        %v299 = vld [vmem:[%s226 + $0x228] sm:$0xff]
        %v300 = vld [vmem:[%s226 + $0x230] sm:$0xff]
        %v301 = vld [vmem:[%s226 + $0x238] sm:$0xff]
        %v302 = vld [vmem:[%s226 + $0x240] sm:$0xff]
        %v303 = vld [vmem:[%s226 + $0x248] sm:$0xff]
        %v304 = vld [vmem:[%s226 + $0x250] sm:$0xff]
        %v305 = vld [vmem:[%s226 + $0x258] sm:$0xff]
        %v306 = vld [vmem:[%s226 + $0x260] sm:$0xff]
        %v307 = vld [vmem:[%s226 + $0x268] sm:$0xff]
        %v308 = vld [vmem:[%s226 + $0x270] sm:$0xff]
        %v309 = vld [vmem:[%s226 + $0x278] sm:$0xff]
        %v310 = vld [vmem:[%s226 + $0x280] sm:$0xff]
        %v311 = vld [vmem:[%s226 + $0x288] sm:$0xff]
        %v312 = vld [vmem:[%s226 + $0x290] sm:$0xff]
        %v313 = vld [vmem:[%s226 + $0x298] sm:$0xff]
        %v314 = vld [vmem:[%s226 + $0x2a0] sm:$0xff]
        %v315 = vld [vmem:[%s226 + $0x2a8] sm:$0xff]
        %v316 = vld [vmem:[%s226 + $0x2b0] sm:$0xff]
        %v317 = vld [vmem:[%s226 + $0x2b8] sm:$0xff]
        %v318 = vld [vmem:[%s226 + $0x2c0] sm:$0xff]
        %v319 = vld [vmem:[%s226 + $0x2c8] sm:$0xff]
        %v320 = vld [vmem:[%s226 + $0x2d0] sm:$0xff]
        %v321 = vld [vmem:[%s226 + $0x2d8] sm:$0xff]
        %v322 = vld [vmem:[%s226 + $0x2e0] sm:$0xff]
        %v323 = vld [vmem:[%s226 + $0x2e8] sm:$0xff]
        %v324 = vld [vmem:[%s226 + $0x2f0] sm:$0xff]
        %v325 = vld [vmem:[%s226 + $0x2f8] sm:$0xff]
        %v326 = vld [vmem:[%s226 + $0x300] sm:$0xff]
        %v327 = vld [vmem:[%s226 + $0x308] sm:$0xff]
        %v328 = vld [vmem:[%s226 + $0x310] sm:$0xff]
        %v329 = vld [vmem:[%s226 + $0x318] sm:$0xff]
        %v330 = vld [vmem:[%s226 + $0x320] sm:$0xff]
        %v331 = vld [vmem:[%s226 + $0x328] sm:$0xff]
        %v332 = vld [vmem:[%s226 + $0x330] sm:$0xff]
        %v333 = vld [vmem:[%s226 + $0x338] sm:$0xff]
        %v334 = vld [vmem:[%s226 + $0x340] sm:$0xff]
        %v335 = vld [vmem:[%s226 + $0x348] sm:$0xff]
        %v336 = vld [vmem:[%s226 + $0x350] sm:$0xff]
        %v337 = vld [vmem:[%s226 + $0x358] sm:$0xff]
        %v338 = vld [vmem:[%s226 + $0x360] sm:$0xff]
        %v339 = vld [vmem:[%s226 + $0x368] sm:$0xff]
        %v340 = vld [vmem:[%s226 + $0x370] sm:$0xff]
        %v341 = vld [vmem:[%s226 + $0x378] sm:$0xff]
        %v342 = vpack.c.bf16 %v237, %v230
        %v343 = vpack.c.bf16 %v238, %v231
        %v344 = vpack.c.bf16 %v239, %v232
        %v345 = vpack.c.bf16 %v240, %v233
        %v346 = vpack.c.bf16 %v241, %v234
        %v347 = vpack.c.bf16 %v242, %v235
        %v348 = vpack.c.bf16 %v243, %v236
        %v349 = vpack.c.bf16 %v251, %v244
        %v350 = vpack.c.bf16 %v252, %v245
        %v351 = vpack.c.bf16 %v253, %v246
        %v352 = vpack.c.bf16 %v254, %v247
        %v353 = vpack.c.bf16 %v255, %v248
        %v354 = vpack.c.bf16 %v256, %v249
        %v355 = vpack.c.bf16 %v257, %v250
        %v356 = vpack.c.bf16 %v265, %v258
        %v357 = vpack.c.bf16 %v266, %v259
        %v358 = vpack.c.bf16 %v267, %v260
        %v359 = vpack.c.bf16 %v268, %v261
        %v360 = vpack.c.bf16 %v269, %v262
        %v361 = vpack.c.bf16 %v270, %v263
        %v362 = vpack.c.bf16 %v271, %v264
        %v363 = vpack.c.bf16 %v279, %v272
        %v364 = vpack.c.bf16 %v280, %v273
        %v365 = vpack.c.bf16 %v281, %v274
        %v366 = vpack.c.bf16 %v282, %v275
        %v367 = vpack.c.bf16 %v283, %v276
        %v368 = vpack.c.bf16 %v284, %v277
        %v369 = vpack.c.bf16 %v285, %v278
        %v370 = vpack.c.bf16 %v293, %v286
        %v371 = vpack.c.bf16 %v294, %v287
        %v372 = vpack.c.bf16 %v295, %v288
        %v373 = vpack.c.bf16 %v296, %v289
        %v374 = vpack.c.bf16 %v297, %v290
        %v375 = vpack.c.bf16 %v298, %v291
        %v376 = vpack.c.bf16 %v299, %v292
        %v377 = vpack.c.bf16 %v307, %v300
        %v378 = vpack.c.bf16 %v308, %v301
        %v379 = vpack.c.bf16 %v309, %v302
        %v380 = vpack.c.bf16 %v310, %v303
        %v381 = vpack.c.bf16 %v311, %v304
        %v382 = vpack.c.bf16 %v312, %v305
        %v383 = vpack.c.bf16 %v313, %v306
        %v384 = vpack.c.bf16 %v321, %v314
        %v385 = vpack.c.bf16 %v322, %v315
        %v386 = vpack.c.bf16 %v323, %v316
        %v387 = vpack.c.bf16 %v324, %v317
        %v388 = vpack.c.bf16 %v325, %v318
        %v389 = vpack.c.bf16 %v326, %v319
        %v390 = vpack.c.bf16 %v327, %v320
        %v391 = vpack.c.bf16 %v335, %v328
        %v392 = vpack.c.bf16 %v336, %v329
        %v393 = vpack.c.bf16 %v337, %v330
        %v394 = vpack.c.bf16 %v338, %v331
        %v395 = vpack.c.bf16 %v339, %v332
        %v396 = vpack.c.bf16 %v340, %v333
        %v397 = vpack.c.bf16 %v341, %v334
        %v398 = vld [vmem:[%s1] sm:$0xf]
        %v399 = vld [vmem:[%s1 + $0x4] sm:$0xf]
        %v400 = vld [vmem:[%s1 + $0x8] sm:$0xf]
        %v401 = vld [vmem:[%s1 + $0xc] sm:$0xf]
        %v402 = vld [vmem:[%s1 + $0x10] sm:$0xf]
        %v403 = vld [vmem:[%s1 + $0x14] sm:$0xf]
        %v404 = vld [vmem:[%s1 + $0x18] sm:$0xf]
        %v405 = vld [vmem:[%s1 + $0x1c] sm:$0xf]
        %v406 = vld [vmem:[%s1 + $0x20] sm:$0xf]
        %v407 = vld [vmem:[%s1 + $0x24] sm:$0xf]
        %v408 = vld [vmem:[%s1 + $0x28] sm:$0xf]
        %v409 = vld [vmem:[%s1 + $0x2c] sm:$0xf]
        %v410 = vld [vmem:[%s1 + $0x30] sm:$0xf]
        %v411 = vld [vmem:[%s1 + $0x34] sm:$0xf]
        %v412 = vld [vmem:[%s1 + $0x38] sm:$0xf]
        %v413 = vld [vmem:[%s1 + $0x3c] sm:$0xf]
        %v414 = vld [vmem:[%s1 + $0x40] sm:$0xf]
        %v415 = vld [vmem:[%s1 + $0x44] sm:$0xf]
        %v416 = vld [vmem:[%s1 + $0x48] sm:$0xf]
        %v417 = vld [vmem:[%s1 + $0x4c] sm:$0xf]
        %v418 = vld [vmem:[%s1 + $0x50] sm:$0xf]
        %v419 = vld [vmem:[%s1 + $0x54] sm:$0xf]
        %v420 = vld [vmem:[%s1 + $0x58] sm:$0xf]
        %v421 = vld [vmem:[%s1 + $0x5c] sm:$0xf]
        %v422 = vld [vmem:[%s1 + $0x60] sm:$0xf]
        %v423 = vld [vmem:[%s1 + $0x64] sm:$0xf]
        %v424 = vld [vmem:[%s1 + $0x68] sm:$0xf]
        %v425 = vld [vmem:[%s1 + $0x6c] sm:$0xf]
        %v426 = vld [vmem:[%s1 + $0x70] sm:$0xf]
        %v427 = vld [vmem:[%s1 + $0x74] sm:$0xf]
        %v428 = vld [vmem:[%s1 + $0x78] sm:$0xf]
        %v429 = vld [vmem:[%s1 + $0x7c] sm:$0xf]
        %v430 = vld [vmem:[%s1 + $0x80] sm:$0xf]
        %v431 = vld [vmem:[%s1 + $0x84] sm:$0xf]
        %v432 = vld [vmem:[%s1 + $0x88] sm:$0xf]
        %v433 = vld [vmem:[%s1 + $0x8c] sm:$0xf]
        %v434 = vld [vmem:[%s1 + $0x90] sm:$0xf]
        %v435 = vld [vmem:[%s1 + $0x94] sm:$0xf]
        %v436 = vld [vmem:[%s1 + $0x98] sm:$0xf]
        %v437 = vld [vmem:[%s1 + $0x9c] sm:$0xf]
        %v438 = vld [vmem:[%s1 + $0xa0] sm:$0xf]
        %v439 = vld [vmem:[%s1 + $0xa4] sm:$0xf]
        %v440 = vld [vmem:[%s1 + $0xa8] sm:$0xf]
        %v441 = vld [vmem:[%s1 + $0xac] sm:$0xf]
        %v442 = vld [vmem:[%s1 + $0xb0] sm:$0xf]
        %v443 = vld [vmem:[%s1 + $0xb4] sm:$0xf]
        %v444 = vld [vmem:[%s1 + $0xb8] sm:$0xf]
        %v445 = vld [vmem:[%s1 + $0xbc] sm:$0xf]
        %v446 = vld [vmem:[%s1 + $0xc0] sm:$0xf]
        %v447 = vld [vmem:[%s1 + $0xc4] sm:$0xf]
        %v448 = vld [vmem:[%s1 + $0xc8] sm:$0xf]
        %v449 = vld [vmem:[%s1 + $0xcc] sm:$0xf]
        %v450 = vld [vmem:[%s1 + $0xd0] sm:$0xf]
        %v451 = vld [vmem:[%s1 + $0xd4] sm:$0xf]
        %v452 = vld [vmem:[%s1 + $0xd8] sm:$0xf]
        %v453 = vld [vmem:[%s1 + $0xdc] sm:$0xf]
        %v454 = vld [vmem:[%s1 + $0xe0] sm:$0xf]
        %v455 = vld [vmem:[%s1 + $0xe4] sm:$0xf]
        %v456 = vld [vmem:[%s1 + $0xe8] sm:$0xf]
        %v457 = vld [vmem:[%s1 + $0xec] sm:$0xf]
        %v458 = vld [vmem:[%s1 + $0xf0] sm:$0xf]
        %v459 = vld [vmem:[%s1 + $0xf4] sm:$0xf]
        %v460 = vld [vmem:[%s1 + $0xf8] sm:$0xf]
        %v461 = vld [vmem:[%s1 + $0xfc] sm:$0xf]
        %v462 = vld [vmem:[%s1 + $0x100] sm:$0xf]
        %v463 = vld [vmem:[%s1 + $0x104] sm:$0xf]
        %v464 = vld [vmem:[%s1 + $0x108] sm:$0xf]
        %v465 = vld [vmem:[%s1 + $0x10c] sm:$0xf]
        %v466 = vld [vmem:[%s1 + $0x110] sm:$0xf]
        %v467 = vld [vmem:[%s1 + $0x114] sm:$0xf]
        %v468 = vld [vmem:[%s1 + $0x118] sm:$0xf]
        %v469 = vld [vmem:[%s1 + $0x11c] sm:$0xf]
        %v470 = vld [vmem:[%s1 + $0x120] sm:$0xf]
        %v471 = vld [vmem:[%s1 + $0x124] sm:$0xf]
        %v472 = vld [vmem:[%s1 + $0x128] sm:$0xf]
        %v473 = vld [vmem:[%s1 + $0x12c] sm:$0xf]
        %v474 = vld [vmem:[%s1 + $0x130] sm:$0xf]
        %v475 = vld [vmem:[%s1 + $0x134] sm:$0xf]
        %v476 = vld [vmem:[%s1 + $0x138] sm:$0xf]
        %v477 = vld [vmem:[%s1 + $0x13c] sm:$0xf]
        %v478 = vld [vmem:[%s1 + $0x140] sm:$0xf]
        %v479 = vld [vmem:[%s1 + $0x144] sm:$0xf]
        %v480 = vld [vmem:[%s1 + $0x148] sm:$0xf]
        %v481 = vld [vmem:[%s1 + $0x14c] sm:$0xf]
        %v482 = vld [vmem:[%s1 + $0x150] sm:$0xf]
        %v483 = vld [vmem:[%s1 + $0x154] sm:$0xf]
        %v484 = vld [vmem:[%s1 + $0x158] sm:$0xf]
        %v485 = vld [vmem:[%s1 + $0x15c] sm:$0xf]
        %v486 = vld [vmem:[%s1 + $0x160] sm:$0xf]
        %v487 = vld [vmem:[%s1 + $0x164] sm:$0xf]
        %v488 = vld [vmem:[%s1 + $0x168] sm:$0xf]
        %v489 = vld [vmem:[%s1 + $0x16c] sm:$0xf]
        %v490 = vld [vmem:[%s1 + $0x170] sm:$0xf]
        %v491 = vld [vmem:[%s1 + $0x174] sm:$0xf]
        %v492 = vld [vmem:[%s1 + $0x178] sm:$0xf]
        %v493 = vld [vmem:[%s1 + $0x17c] sm:$0xf]
        %v494 = vld [vmem:[%s1 + $0x180] sm:$0xf]
        %v495 = vld [vmem:[%s1 + $0x184] sm:$0xf]
        %v496 = vld [vmem:[%s2] sm:$0x1]
        %v498 = vperm.slane %v496, 0
        %v598 = vunpack.c.l.b16 %v398
        %v599 = vunpack.c.l.b16 %v399
        %v600 = vunpack.c.l.b16 %v400
        %v601 = vunpack.c.l.b16 %v401
        %v602 = vunpack.c.l.b16 %v402
        %v603 = vunpack.c.l.b16 %v403
        %v604 = vunpack.c.l.b16 %v404
        %v605 = vunpack.c.l.b16 %v405
        %v606 = vunpack.c.l.b16 %v406
        %v607 = vunpack.c.l.b16 %v407
        %v608 = vunpack.c.l.b16 %v408
        %v609 = vunpack.c.l.b16 %v409
        %v610 = vunpack.c.l.b16 %v410
        %v611 = vunpack.c.l.b16 %v411
        %v612 = vunpack.c.l.b16 %v412
        %v613 = vunpack.c.l.b16 %v413
        %v614 = vunpack.c.l.b16 %v414
        %v615 = vunpack.c.l.b16 %v415
        %v616 = vunpack.c.l.b16 %v416
        %v617 = vunpack.c.l.b16 %v417
        %v618 = vunpack.c.l.b16 %v418
        %v619 = vunpack.c.l.b16 %v419
        %v620 = vunpack.c.l.b16 %v420
        %v621 = vunpack.c.l.b16 %v421
        %v622 = vunpack.c.l.b16 %v422
        %v623 = vunpack.c.l.b16 %v423
        %v624 = vunpack.c.l.b16 %v424
        %v625 = vunpack.c.l.b16 %v425
        %v626 = vunpack.c.l.b16 %v426
        %v627 = vunpack.c.l.b16 %v427
        %v628 = vunpack.c.l.b16 %v428
        %v629 = vunpack.c.l.b16 %v429
        %v630 = vunpack.c.l.b16 %v430
        %v631 = vunpack.c.l.b16 %v431
        %v632 = vunpack.c.l.b16 %v432
        %v633 = vunpack.c.l.b16 %v433
        %v634 = vunpack.c.l.b16 %v434
        %v635 = vunpack.c.l.b16 %v435
        %v636 = vunpack.c.l.b16 %v436
        %v637 = vunpack.c.l.b16 %v437
        %v638 = vunpack.c.l.b16 %v438
        %v639 = vunpack.c.l.b16 %v439
        %v640 = vunpack.c.l.b16 %v440
        %v641 = vunpack.c.l.b16 %v441
        %v642 = vunpack.c.l.b16 %v442
        %v643 = vunpack.c.l.b16 %v443
        %v644 = vunpack.c.l.b16 %v444
        %v645 = vunpack.c.l.b16 %v445
        %v646 = vunpack.c.l.b16 %v446
        %v647 = vunpack.c.l.b16 %v447
        %v648 = vunpack.c.l.b16 %v448
        %v649 = vunpack.c.l.b16 %v449
        %v650 = vunpack.c.l.b16 %v450
        %v651 = vunpack.c.l.b16 %v451
        %v652 = vunpack.c.l.b16 %v452
        %v653 = vunpack.c.l.b16 %v453
        %v654 = vunpack.c.l.b16 %v454
        %v655 = vunpack.c.l.b16 %v455
        %v656 = vunpack.c.l.b16 %v456
        %v657 = vunpack.c.l.b16 %v457
        %v658 = vunpack.c.l.b16 %v458
        %v659 = vunpack.c.l.b16 %v459
        %v660 = vunpack.c.l.b16 %v460
        %v661 = vunpack.c.l.b16 %v461
        %v662 = vunpack.c.l.b16 %v462
        %v663 = vunpack.c.l.b16 %v463
        %v664 = vunpack.c.l.b16 %v464
        %v665 = vunpack.c.l.b16 %v465
        %v666 = vunpack.c.l.b16 %v466
        %v667 = vunpack.c.l.b16 %v467
        %v668 = vunpack.c.l.b16 %v468
        %v669 = vunpack.c.l.b16 %v469
        %v670 = vunpack.c.l.b16 %v470
        %v671 = vunpack.c.l.b16 %v471
        %v672 = vunpack.c.l.b16 %v472
        %v673 = vunpack.c.l.b16 %v473
        %v674 = vunpack.c.l.b16 %v474
        %v675 = vunpack.c.l.b16 %v475
        %v676 = vunpack.c.l.b16 %v476
        %v677 = vunpack.c.l.b16 %v477
        %v678 = vunpack.c.l.b16 %v478
        %v679 = vunpack.c.l.b16 %v479
        %v680 = vunpack.c.l.b16 %v480
        %v681 = vunpack.c.l.b16 %v481
        %v682 = vunpack.c.l.b16 %v482
        %v683 = vunpack.c.l.b16 %v483
        %v684 = vunpack.c.l.b16 %v484
        %v685 = vunpack.c.l.b16 %v485
        %v686 = vunpack.c.l.b16 %v486
        %v687 = vunpack.c.l.b16 %v487
        %v688 = vunpack.c.l.b16 %v488
        %v689 = vunpack.c.l.b16 %v489
        %v690 = vunpack.c.l.b16 %v490
        %v691 = vunpack.c.l.b16 %v491
        %v692 = vunpack.c.l.b16 %v492
        %v693 = vunpack.c.l.b16 %v493
        %v694 = vunpack.c.l.b16 %v494
        %v695 = vunpack.c.l.b16 %v495
        %v696 = vpack.c.b16 %v599, %v598
        %v697 = vpack.c.b16 %v601, %v600
        %v698 = vpack.c.b16 %v603, %v602
        %v699 = vpack.c.b16 %v605, %v604
        %v700 = vpack.c.b16 %v607, %v606
        %v701 = vpack.c.b16 %v609, %v608
        %v702 = vpack.c.b16 %v611, %v610
        %v703 = vpack.c.b16 %v613, %v612
        %v704 = vpack.c.b16 %v615, %v614
        %v705 = vpack.c.b16 %v617, %v616
        %v706 = vpack.c.b16 %v619, %v618
        %v707 = vpack.c.b16 %v621, %v620
        %v708 = vpack.c.b16 %v623, %v622
        %v709 = vpack.c.b16 %v625, %v624
        %v710 = vpack.c.b16 %v627, %v626
        %v711 = vpack.c.b16 %v629, %v628
        %v712 = vpack.c.b16 %v631, %v630
        %v713 = vpack.c.b16 %v633, %v632
        %v714 = vpack.c.b16 %v635, %v634
        %v715 = vpack.c.b16 %v637, %v636
        %v716 = vpack.c.b16 %v639, %v638
        %v717 = vpack.c.b16 %v641, %v640
        %v718 = vpack.c.b16 %v643, %v642
        %v719 = vpack.c.b16 %v645, %v644
        %v720 = vpack.c.b16 %v647, %v646
        %v721 = vpack.c.b16 %v649, %v648
        %v722 = vpack.c.b16 %v651, %v650
        %v723 = vpack.c.b16 %v653, %v652
        %v724 = vpack.c.b16 %v655, %v654
        %v725 = vpack.c.b16 %v657, %v656
        %v726 = vpack.c.b16 %v659, %v658
        %v727 = vpack.c.b16 %v661, %v660
        %v728 = vpack.c.b16 %v663, %v662
        %v729 = vpack.c.b16 %v665, %v664
        %v730 = vpack.c.b16 %v667, %v666
        %v731 = vpack.c.b16 %v669, %v668
        %v732 = vpack.c.b16 %v671, %v670
        %v733 = vpack.c.b16 %v673, %v672
        %v734 = vpack.c.b16 %v675, %v674
        %v735 = vpack.c.b16 %v677, %v676
        %v736 = vpack.c.b16 %v679, %v678
        %v737 = vpack.c.b16 %v681, %v680
        %v738 = vpack.c.b16 %v683, %v682
        %v739 = vpack.c.b16 %v685, %v684
        %v740 = vpack.c.b16 %v687, %v686
        %v741 = vpack.c.b16 %v689, %v688
        %v742 = vpack.c.b16 %v691, %v690
        %v743 = vpack.c.b16 %v693, %v692
        %v744 = vpack.c.b16 %v695, %v694
        %vm794 = vcmask 130048
        %v796 = vsel %vm794, %v348, 0
        %v799 = vsel %vm794, %v355, 0
        %v802 = vsel %vm794, %v362, 0
        %v805 = vsel %vm794, %v369, 0
        %v808 = vsel %vm794, %v376, 0
        %v811 = vsel %vm794, %v383, 0
        %v814 = vsel %vm794, %v390, 0
        %v817 = vsel %vm794, %v397, 0
        %819 = vmatpush.bf16.msra.mxu0 %v703
        %820 = vmatpush.bf16.msra.mxu0 %v702
        %821 = vmatpush.bf16.msra.mxu0 %v701
        %822 = vmatpush.bf16.msra.mxu0 %v700
        %823 = vmatpush.bf16.msra.mxu0 %v699
        %824 = vmatpush.bf16.msra.mxu0 %v698
        %825 = vmatpush.bf16.msra.mxu0 %v697
        %826 = vmatpush.bf16.msra.mxu0 %v696
        %827 = vmatmul.bf16.gmra.mxu0 %v342
        %v828 = vpop.f32.mrf.mxu0
        %v829 = vadd.f32 %v498, %v828
        %v830 = vpop.f32.mrf.mxu0
        %v831 = vadd.f32 %v498, %v830
        %832 = vmatmul.bf16.gmra.mxu0 %v349
        %v833 = vpop.f32.mrf.mxu0
        %v834 = vadd.f32 %v498, %v833
        %v835 = vpop.f32.mrf.mxu0
        %v836 = vadd.f32 %v498, %v835
        %837 = vmatmul.bf16.gmra.mxu0 %v356
        %v838 = vpop.f32.mrf.mxu0
        %v839 = vadd.f32 %v498, %v838
        %v840 = vpop.f32.mrf.mxu0
        %v841 = vadd.f32 %v498, %v840
        %842 = vmatmul.bf16.gmra.mxu0 %v363
        %v843 = vpop.f32.mrf.mxu0
        %v844 = vadd.f32 %v498, %v843
        %v845 = vpop.f32.mrf.mxu0
        %v846 = vadd.f32 %v498, %v845
        %847 = vmatmul.bf16.gmra.mxu0 %v370
        %v848 = vpop.f32.mrf.mxu0
        %v849 = vadd.f32 %v498, %v848
        %v850 = vpop.f32.mrf.mxu0
        %v851 = vadd.f32 %v498, %v850
        %852 = vmatmul.bf16.gmra.mxu0 %v377
        %v853 = vpop.f32.mrf.mxu0
        %v854 = vadd.f32 %v498, %v853
        %v855 = vpop.f32.mrf.mxu0
        %v856 = vadd.f32 %v498, %v855
        %857 = vmatmul.bf16.gmra.mxu0 %v384
        %v858 = vpop.f32.mrf.mxu0
        %v859 = vadd.f32 %v498, %v858
        %v860 = vpop.f32.mrf.mxu0
        %v861 = vadd.f32 %v498, %v860
        %862 = vmatmul.bf16.gmra.mxu0 %v391
        %v863 = vpop.f32.mrf.mxu0
        %v864 = vadd.f32 %v498, %v863
        %v865 = vpop.f32.mrf.mxu0
        %v866 = vadd.f32 %v498, %v865
        %867 = vdwg.mxu0
        %868 = vmatpush.bf16.msra.mxu0 %v711
        %869 = vmatpush.bf16.msra.mxu0 %v710
        %870 = vmatpush.bf16.msra.mxu0 %v709
        %871 = vmatpush.bf16.msra.mxu0 %v708
        %872 = vmatpush.bf16.msra.mxu0 %v707
        %873 = vmatpush.bf16.msra.mxu0 %v706
        %874 = vmatpush.bf16.msra.mxu0 %v705
        %875 = vmatpush.bf16.msra.mxu0 %v704
        %876 = vmatmul.bf16.gmra.mxu0 %v343
        %v877 = vpop.f32.mrf.mxu0
        %v878 = vadd.f32 %v829, %v877
        %v879 = vpop.f32.mrf.mxu0
        %v880 = vadd.f32 %v831, %v879
        %881 = vmatmul.bf16.gmra.mxu0 %v350
        %v882 = vpop.f32.mrf.mxu0
        %v883 = vadd.f32 %v834, %v882
        %v884 = vpop.f32.mrf.mxu0
        %v885 = vadd.f32 %v836, %v884
        %886 = vmatmul.bf16.gmra.mxu0 %v357
        %v887 = vpop.f32.mrf.mxu0
        %v888 = vadd.f32 %v839, %v887
        %v889 = vpop.f32.mrf.mxu0
        %v890 = vadd.f32 %v841, %v889
        %891 = vmatmul.bf16.gmra.mxu0 %v364
        %v892 = vpop.f32.mrf.mxu0
        %v893 = vadd.f32 %v844, %v892
        %v894 = vpop.f32.mrf.mxu0
        %v895 = vadd.f32 %v846, %v894
        %896 = vmatmul.bf16.gmra.mxu0 %v371
        %v897 = vpop.f32.mrf.mxu0
        %v898 = vadd.f32 %v849, %v897
        %v899 = vpop.f32.mrf.mxu0
        %v900 = vadd.f32 %v851, %v899
        %901 = vmatmul.bf16.gmra.mxu0 %v378
        %v902 = vpop.f32.mrf.mxu0
        %v903 = vadd.f32 %v854, %v902
        %v904 = vpop.f32.mrf.mxu0
        %v905 = vadd.f32 %v856, %v904
        %906 = vmatmul.bf16.gmra.mxu0 %v385
        %v907 = vpop.f32.mrf.mxu0
        %v908 = vadd.f32 %v859, %v907
        %v909 = vpop.f32.mrf.mxu0
        %v910 = vadd.f32 %v861, %v909
        %911 = vmatmul.bf16.gmra.mxu0 %v392
        %v912 = vpop.f32.mrf.mxu0
        %v913 = vadd.f32 %v864, %v912
        %v914 = vpop.f32.mrf.mxu0
        %v915 = vadd.f32 %v866, %v914
        %916 = vdwg.mxu0
        %917 = vmatpush.bf16.msra.mxu0 %v719
        %918 = vmatpush.bf16.msra.mxu0 %v718
        %919 = vmatpush.bf16.msra.mxu0 %v717
        %920 = vmatpush.bf16.msra.mxu0 %v716
        %921 = vmatpush.bf16.msra.mxu0 %v715
        %922 = vmatpush.bf16.msra.mxu0 %v714
        %923 = vmatpush.bf16.msra.mxu0 %v713
        %924 = vmatpush.bf16.msra.mxu0 %v712
        %925 = vmatmul.bf16.gmra.mxu0 %v344
        %v926 = vpop.f32.mrf.mxu0
        %v927 = vadd.f32 %v878, %v926
        %v928 = vpop.f32.mrf.mxu0
        %v929 = vadd.f32 %v880, %v928
        %930 = vmatmul.bf16.gmra.mxu0 %v351
        %v931 = vpop.f32.mrf.mxu0
        %v932 = vadd.f32 %v883, %v931
        %v933 = vpop.f32.mrf.mxu0
        %v934 = vadd.f32 %v885, %v933
        %935 = vmatmul.bf16.gmra.mxu0 %v358
        %v936 = vpop.f32.mrf.mxu0
        %v937 = vadd.f32 %v888, %v936
        %v938 = vpop.f32.mrf.mxu0
        %v939 = vadd.f32 %v890, %v938
        %940 = vmatmul.bf16.gmra.mxu0 %v365
        %v941 = vpop.f32.mrf.mxu0
        %v942 = vadd.f32 %v893, %v941
        %v943 = vpop.f32.mrf.mxu0
        %v944 = vadd.f32 %v895, %v943
        %945 = vmatmul.bf16.gmra.mxu0 %v372
        %v946 = vpop.f32.mrf.mxu0
        %v947 = vadd.f32 %v898, %v946
        %v948 = vpop.f32.mrf.mxu0
        %v949 = vadd.f32 %v900, %v948
        %950 = vmatmul.bf16.gmra.mxu0 %v379
        %v951 = vpop.f32.mrf.mxu0
        %v952 = vadd.f32 %v903, %v951
        %v953 = vpop.f32.mrf.mxu0
        %v954 = vadd.f32 %v905, %v953
        %955 = vmatmul.bf16.gmra.mxu0 %v386
        %v956 = vpop.f32.mrf.mxu0
        %v957 = vadd.f32 %v908, %v956
        %v958 = vpop.f32.mrf.mxu0
        %v959 = vadd.f32 %v910, %v958
        %960 = vmatmul.bf16.gmra.mxu0 %v393
        %v961 = vpop.f32.mrf.mxu0
        %v962 = vadd.f32 %v913, %v961
        %v963 = vpop.f32.mrf.mxu0
        %v964 = vadd.f32 %v915, %v963
        %965 = vdwg.mxu0
        %966 = vmatpush.bf16.msra.mxu0 %v727
        %967 = vmatpush.bf16.msra.mxu0 %v726
        %968 = vmatpush.bf16.msra.mxu0 %v725
        %969 = vmatpush.bf16.msra.mxu0 %v724
        %970 = vmatpush.bf16.msra.mxu0 %v723
        %971 = vmatpush.bf16.msra.mxu0 %v722
        %972 = vmatpush.bf16.msra.mxu0 %v721
        %973 = vmatpush.bf16.msra.mxu0 %v720
        %974 = vmatmul.bf16.gmra.mxu0 %v345
        %v975 = vpop.f32.mrf.mxu0
        %v976 = vadd.f32 %v927, %v975
        %v977 = vpop.f32.mrf.mxu0
        %v978 = vadd.f32 %v929, %v977
        %979 = vmatmul.bf16.gmra.mxu0 %v352
        %v980 = vpop.f32.mrf.mxu0
        %v981 = vadd.f32 %v932, %v980
        %v982 = vpop.f32.mrf.mxu0
        %v983 = vadd.f32 %v934, %v982
        %984 = vmatmul.bf16.gmra.mxu0 %v359
        %v985 = vpop.f32.mrf.mxu0
        %v986 = vadd.f32 %v937, %v985
        %v987 = vpop.f32.mrf.mxu0
        %v988 = vadd.f32 %v939, %v987
        %989 = vmatmul.bf16.gmra.mxu0 %v366
        %v990 = vpop.f32.mrf.mxu0
        %v991 = vadd.f32 %v942, %v990
        %v992 = vpop.f32.mrf.mxu0
        %v993 = vadd.f32 %v944, %v992
        %994 = vmatmul.bf16.gmra.mxu0 %v373
        %v995 = vpop.f32.mrf.mxu0
        %v996 = vadd.f32 %v947, %v995
        %v997 = vpop.f32.mrf.mxu0
        %v998 = vadd.f32 %v949, %v997
        %999 = vmatmul.bf16.gmra.mxu0 %v380
        %v1000 = vpop.f32.mrf.mxu0
        %v1001 = vadd.f32 %v952, %v1000
        %v1002 = vpop.f32.mrf.mxu0
        %v1003 = vadd.f32 %v954, %v1002
        %1004 = vmatmul.bf16.gmra.mxu0 %v387
        %v1005 = vpop.f32.mrf.mxu0
        %v1006 = vadd.f32 %v957, %v1005
        %v1007 = vpop.f32.mrf.mxu0
        %v1008 = vadd.f32 %v959, %v1007
        %1009 = vmatmul.bf16.gmra.mxu0 %v394
        %v1010 = vpop.f32.mrf.mxu0
        %v1011 = vadd.f32 %v962, %v1010
        %v1012 = vpop.f32.mrf.mxu0
        %v1013 = vadd.f32 %v964, %v1012
        %1014 = vdwg.mxu0
        %1015 = vmatpush.bf16.msra.mxu0 %v735
        %1016 = vmatpush.bf16.msra.mxu0 %v734
        %1017 = vmatpush.bf16.msra.mxu0 %v733
        %1018 = vmatpush.bf16.msra.mxu0 %v732
        %1019 = vmatpush.bf16.msra.mxu0 %v731
        %1020 = vmatpush.bf16.msra.mxu0 %v730
        %1021 = vmatpush.bf16.msra.mxu0 %v729
        %1022 = vmatpush.bf16.msra.mxu0 %v728
        %1023 = vmatmul.bf16.gmra.mxu0 %v346
        %v1024 = vpop.f32.mrf.mxu0
        %v1025 = vadd.f32 %v976, %v1024
        %v1026 = vpop.f32.mrf.mxu0
        %v1027 = vadd.f32 %v978, %v1026
        %1028 = vmatmul.bf16.gmra.mxu0 %v353
        %v1029 = vpop.f32.mrf.mxu0
        %v1030 = vadd.f32 %v981, %v1029
        %v1031 = vpop.f32.mrf.mxu0
        %v1032 = vadd.f32 %v983, %v1031
        %1033 = vmatmul.bf16.gmra.mxu0 %v360
        %v1034 = vpop.f32.mrf.mxu0
        %v1035 = vadd.f32 %v986, %v1034
        %v1036 = vpop.f32.mrf.mxu0
        %v1037 = vadd.f32 %v988, %v1036
        %1038 = vmatmul.bf16.gmra.mxu0 %v367
        %v1039 = vpop.f32.mrf.mxu0
        %v1040 = vadd.f32 %v991, %v1039
        %v1041 = vpop.f32.mrf.mxu0
        %v1042 = vadd.f32 %v993, %v1041
        %1043 = vmatmul.bf16.gmra.mxu0 %v374
        %v1044 = vpop.f32.mrf.mxu0
        %v1045 = vadd.f32 %v996, %v1044
        %v1046 = vpop.f32.mrf.mxu0
        %v1047 = vadd.f32 %v998, %v1046
        %1048 = vmatmul.bf16.gmra.mxu0 %v381
        %v1049 = vpop.f32.mrf.mxu0
        %v1050 = vadd.f32 %v1001, %v1049
        %v1051 = vpop.f32.mrf.mxu0
        %v1052 = vadd.f32 %v1003, %v1051
        %1053 = vmatmul.bf16.gmra.mxu0 %v388
        %v1054 = vpop.f32.mrf.mxu0
        %v1055 = vadd.f32 %v1006, %v1054
        %v1056 = vpop.f32.mrf.mxu0
        %v1057 = vadd.f32 %v1008, %v1056
        %1058 = vmatmul.bf16.gmra.mxu0 %v395
        %v1059 = vpop.f32.mrf.mxu0
        %v1060 = vadd.f32 %v1011, %v1059
        %v1061 = vpop.f32.mrf.mxu0
        %v1062 = vadd.f32 %v1013, %v1061
        %1063 = vdwg.mxu0
        %1064 = vmatpush.bf16.msra.mxu0 %v743
        %1065 = vmatpush.bf16.msra.mxu0 %v742
        %1066 = vmatpush.bf16.msra.mxu0 %v741
        %1067 = vmatpush.bf16.msra.mxu0 %v740
        %1068 = vmatpush.bf16.msra.mxu0 %v739
        %1069 = vmatpush.bf16.msra.mxu0 %v738
        %1070 = vmatpush.bf16.msra.mxu0 %v737
        %1071 = vmatpush.bf16.msra.mxu0 %v736
        %1072 = vmatmul.bf16.gmra.mxu0 %v347
        %v1073 = vpop.f32.mrf.mxu0
        %v1074 = vadd.f32 %v1025, %v1073
        %v1075 = vpop.f32.mrf.mxu0
        %v1076 = vadd.f32 %v1027, %v1075
        %1077 = vmatmul.bf16.gmra.mxu0 %v354
        %v1078 = vpop.f32.mrf.mxu0
        %v1079 = vadd.f32 %v1030, %v1078
        %v1080 = vpop.f32.mrf.mxu0
        %v1081 = vadd.f32 %v1032, %v1080
        %1082 = vmatmul.bf16.gmra.mxu0 %v361
        %v1083 = vpop.f32.mrf.mxu0
        %v1084 = vadd.f32 %v1035, %v1083
        %v1085 = vpop.f32.mrf.mxu0
        %v1086 = vadd.f32 %v1037, %v1085
        %1087 = vmatmul.bf16.gmra.mxu0 %v368
        %v1088 = vpop.f32.mrf.mxu0
        %v1089 = vadd.f32 %v1040, %v1088
        %v1090 = vpop.f32.mrf.mxu0
        %v1091 = vadd.f32 %v1042, %v1090
        %1092 = vmatmul.bf16.gmra.mxu0 %v375
        %v1093 = vpop.f32.mrf.mxu0
        %v1094 = vadd.f32 %v1045, %v1093
        %v1095 = vpop.f32.mrf.mxu0
        %v1096 = vadd.f32 %v1047, %v1095
        %1097 = vmatmul.bf16.gmra.mxu0 %v382
        %v1098 = vpop.f32.mrf.mxu0
        %v1099 = vadd.f32 %v1050, %v1098
        %v1100 = vpop.f32.mrf.mxu0
        %v1101 = vadd.f32 %v1052, %v1100
        %1102 = vmatmul.bf16.gmra.mxu0 %v389
        %v1103 = vpop.f32.mrf.mxu0
        %v1104 = vadd.f32 %v1055, %v1103
        %v1105 = vpop.f32.mrf.mxu0
        %v1106 = vadd.f32 %v1057, %v1105
        %1107 = vmatmul.bf16.gmra.mxu0 %v396
        %v1108 = vpop.f32.mrf.mxu0
        %v1109 = vadd.f32 %v1060, %v1108
        %v1110 = vpop.f32.mrf.mxu0
        %v1111 = vadd.f32 %v1062, %v1110
        %1112 = vdwg.mxu0
        %1113 = vmatpush.bf16.msra.mxu0 0
        %1114 = vmatpush.bf16.msra.mxu0 0
        %1115 = vmatpush.bf16.msra.mxu0 0
        %1116 = vmatpush.bf16.msra.mxu0 0
        %1117 = vmatpush.bf16.msra.mxu0 0
        %1118 = vmatpush.bf16.msra.mxu0 0
        %1119 = vmatpush.bf16.msra.mxu0 0
        %1120 = vmatpush.bf16.msra.mxu0 %v744
        %1121 = vmatmul.bf16.gmra.mxu0 %v796
        %v1122 = vpop.f32.mrf.mxu0
        %v1123 = vadd.f32 %v1074, %v1122
        %v1124 = vpop.f32.mrf.mxu0
        %v1125 = vadd.f32 %v1076, %v1124
        %1126 = vmatmul.bf16.gmra.mxu0 %v799
        %v1127 = vpop.f32.mrf.mxu0
        %v1128 = vadd.f32 %v1079, %v1127
        %v1129 = vpop.f32.mrf.mxu0
        %v1130 = vadd.f32 %v1081, %v1129
        %1131 = vmatmul.bf16.gmra.mxu0 %v802
        %v1132 = vpop.f32.mrf.mxu0
        %v1133 = vadd.f32 %v1084, %v1132
        %v1134 = vpop.f32.mrf.mxu0
        %v1135 = vadd.f32 %v1086, %v1134
        %1136 = vmatmul.bf16.gmra.mxu0 %v805
        %v1137 = vpop.f32.mrf.mxu0
        %v1138 = vadd.f32 %v1089, %v1137
        %v1139 = vpop.f32.mrf.mxu0
        %v1140 = vadd.f32 %v1091, %v1139
        %1141 = vmatmul.bf16.gmra.mxu0 %v808
        %v1142 = vpop.f32.mrf.mxu0
        %v1143 = vadd.f32 %v1094, %v1142
        %v1144 = vpop.f32.mrf.mxu0
        %v1145 = vadd.f32 %v1096, %v1144
        %1146 = vmatmul.bf16.gmra.mxu0 %v811
        %v1147 = vpop.f32.mrf.mxu0
        %v1148 = vadd.f32 %v1099, %v1147
        %v1149 = vpop.f32.mrf.mxu0
        %v1150 = vadd.f32 %v1101, %v1149
        %1151 = vmatmul.bf16.gmra.mxu0 %v814
        %v1152 = vpop.f32.mrf.mxu0
        %v1153 = vadd.f32 %v1104, %v1152
        %v1154 = vpop.f32.mrf.mxu0
        %v1155 = vadd.f32 %v1106, %v1154
        %1156 = vmatmul.bf16.gmra.mxu0 %v817
        %v1157 = vpop.f32.mrf.mxu0
        %v1158 = vadd.f32 %v1109, %v1157
        %v1159 = vpop.f32.mrf.mxu0
        %v1160 = vadd.f32 %v1111, %v1159
        %1161 = vdwg.mxu0
        %v1162 = vmax.f32 %v1123, 0.0
        %v1163 = vmax.f32 %v1125, 0.0
        %v1164 = vmax.f32 %v1128, 0.0
        %v1165 = vmax.f32 %v1130, 0.0
        %v1166 = vmax.f32 %v1133, 0.0
        %v1167 = vmax.f32 %v1135, 0.0
        %v1168 = vmax.f32 %v1138, 0.0
        %v1169 = vmax.f32 %v1140, 0.0
        %v1170 = vmax.f32 %v1143, 0.0
        %v1171 = vmax.f32 %v1145, 0.0
        %v1172 = vmax.f32 %v1148, 0.0
        %v1173 = vmax.f32 %v1150, 0.0
        %v1174 = vmax.f32 %v1153, 0.0
        %v1175 = vmax.f32 %v1155, 0.0
        %v1176 = vmax.f32 %v1158, 0.0
        %v1177 = vmax.f32 %v1160, 0.0
        %v1178 = vpack.c.bf16 %v1163, %v1162
        %v1179 = vpack.c.bf16 %v1165, %v1164
        %v1180 = vpack.c.bf16 %v1167, %v1166
        %v1181 = vpack.c.bf16 %v1169, %v1168
        %v1182 = vpack.c.bf16 %v1171, %v1170
        %v1183 = vpack.c.bf16 %v1173, %v1172
        %v1184 = vpack.c.bf16 %v1175, %v1174
        %v1185 = vpack.c.bf16 %v1177, %v1176
        %v1186 = vld [vmem:[%s3] sm:$0xf]
        %v1187 = vld [vmem:[%s3 + $0x4] sm:$0xf]
        %v1188 = vld [vmem:[%s3 + $0x8] sm:$0xf]
        %v1189 = vld [vmem:[%s3 + $0xc] sm:$0xf]
        %v1190 = vld [vmem:[%s3 + $0x10] sm:$0xf]
        %v1191 = vld [vmem:[%s3 + $0x14] sm:$0xf]
        %v1192 = vld [vmem:[%s3 + $0x18] sm:$0xf]
        %v1193 = vld [vmem:[%s3 + $0x1c] sm:$0xf]
        %v1194 = vld [vmem:[%s3 + $0x20] sm:$0xf]
        %v1195 = vld [vmem:[%s3 + $0x24] sm:$0xf]
        %v1196 = vld [vmem:[%s3 + $0x28] sm:$0xf]
        %v1197 = vld [vmem:[%s3 + $0x2c] sm:$0xf]
        %v1198 = vld [vmem:[%s3 + $0x30] sm:$0xf]
        %v1199 = vld [vmem:[%s3 + $0x34] sm:$0xf]
        %v1200 = vld [vmem:[%s3 + $0x38] sm:$0xf]
        %v1201 = vld [vmem:[%s3 + $0x3c] sm:$0xf]
        %v1202 = vld [vmem:[%s4] sm:$0x1]
        %v1204 = vperm.slane %v1202, 0
        %v1222 = vunpack.c.l.b16 %v1186
        %v1223 = vunpack.c.l.b16 %v1187
        %v1224 = vunpack.c.l.b16 %v1188
        %v1225 = vunpack.c.l.b16 %v1189
        %v1226 = vunpack.c.l.b16 %v1190
        %v1227 = vunpack.c.l.b16 %v1191
        %v1228 = vunpack.c.l.b16 %v1192
        %v1229 = vunpack.c.l.b16 %v1193
        %v1230 = vunpack.c.l.b16 %v1194
        %v1231 = vunpack.c.l.b16 %v1195
        %v1232 = vunpack.c.l.b16 %v1196
        %v1233 = vunpack.c.l.b16 %v1197
        %v1234 = vunpack.c.l.b16 %v1198
        %v1235 = vunpack.c.l.b16 %v1199
        %v1236 = vunpack.c.l.b16 %v1200
        %v1237 = vunpack.c.l.b16 %v1201
        %v1238 = vpack.c.b16 %v1223, %v1222
        %v1239 = vpack.c.b16 %v1225, %v1224
        %v1240 = vpack.c.b16 %v1227, %v1226
        %v1241 = vpack.c.b16 %v1229, %v1228
        %v1242 = vpack.c.b16 %v1231, %v1230
        %v1243 = vpack.c.b16 %v1233, %v1232
        %v1244 = vpack.c.b16 %v1235, %v1234
        %v1245 = vpack.c.b16 %v1237, %v1236
        %1254 = vmatpush.bf16.msra.mxu0 %v1245
        %1255 = vmatpush.bf16.msra.mxu0 %v1244
        %1256 = vmatpush.bf16.msra.mxu0 %v1243
        %1257 = vmatpush.bf16.msra.mxu0 %v1242
        %1258 = vmatpush.bf16.msra.mxu0 %v1241
        %1259 = vmatpush.bf16.msra.mxu0 %v1240
        %1260 = vmatpush.bf16.msra.mxu0 %v1239
        %1261 = vmatpush.bf16.msra.mxu0 %v1238
        %1262 = vmatmul.bf16.gmra.mxu0 %v1178
        %v1263 = vpop.f32.mrf.mxu0
        %v1264 = vadd.f32 %v1204, %v1263
        %v1265 = vpop.f32.mrf.mxu0
        %v1266 = vadd.f32 %v1204, %v1265
        %1267 = vmatmul.bf16.gmra.mxu0 %v1179
        %v1268 = vpop.f32.mrf.mxu0
        %v1269 = vadd.f32 %v1204, %v1268
        %v1270 = vpop.f32.mrf.mxu0
        %v1271 = vadd.f32 %v1204, %v1270
        %1272 = vmatmul.bf16.gmra.mxu0 %v1180
        %v1273 = vpop.f32.mrf.mxu0
        %v1274 = vadd.f32 %v1204, %v1273
        %v1275 = vpop.f32.mrf.mxu0
        %v1276 = vadd.f32 %v1204, %v1275
        %1277 = vmatmul.bf16.gmra.mxu0 %v1181
        %v1278 = vpop.f32.mrf.mxu0
        %v1279 = vadd.f32 %v1204, %v1278
        %v1280 = vpop.f32.mrf.mxu0
        %v1281 = vadd.f32 %v1204, %v1280
        %1282 = vmatmul.bf16.gmra.mxu0 %v1182
        %v1283 = vpop.f32.mrf.mxu0
        %v1284 = vadd.f32 %v1204, %v1283
        %v1285 = vpop.f32.mrf.mxu0
        %v1286 = vadd.f32 %v1204, %v1285
        %1287 = vmatmul.bf16.gmra.mxu0 %v1183
        %v1288 = vpop.f32.mrf.mxu0
        %v1289 = vadd.f32 %v1204, %v1288
        %v1290 = vpop.f32.mrf.mxu0
        %v1291 = vadd.f32 %v1204, %v1290
        %1292 = vmatmul.bf16.gmra.mxu0 %v1184
        %v1293 = vpop.f32.mrf.mxu0
        %v1294 = vadd.f32 %v1204, %v1293
        %v1295 = vpop.f32.mrf.mxu0
        %v1296 = vadd.f32 %v1204, %v1295
        %1297 = vmatmul.bf16.gmra.mxu0 %v1185
        %v1298 = vpop.f32.mrf.mxu0
        %v1299 = vadd.f32 %v1204, %v1298
        %v1300 = vpop.f32.mrf.mxu0
        %v1301 = vadd.f32 %v1204, %v1300
        %1302 = vdwg.mxu0
        %v1303 = vpack.c.bf16 %v1264, %v1264
        %v1304 = vpack.c.bf16 %v1266, %v1266
        %v1305 = vpack.c.bf16 %v1269, %v1269
        %v1306 = vpack.c.bf16 %v1271, %v1271
        %v1307 = vpack.c.bf16 %v1274, %v1274
        %v1308 = vpack.c.bf16 %v1276, %v1276
        %v1309 = vpack.c.bf16 %v1279, %v1279
        %v1310 = vpack.c.bf16 %v1281, %v1281
        %v1311 = vpack.c.bf16 %v1284, %v1284
        %v1312 = vpack.c.bf16 %v1286, %v1286
        %v1313 = vpack.c.bf16 %v1289, %v1289
        %v1314 = vpack.c.bf16 %v1291, %v1291
        %v1315 = vpack.c.bf16 %v1294, %v1294
        %v1316 = vpack.c.bf16 %v1296, %v1296
        %v1317 = vpack.c.bf16 %v1299, %v1299
        %v1318 = vpack.c.bf16 %v1301, %v1301
        %1319 = vst [vmem:[%s220] sm:$0xf] %v1303
        %1320 = vst [vmem:[%s220 + $0x4] sm:$0xf] %v1304
        %1321 = vst [vmem:[%s220 + $0x8] sm:$0xf] %v1305
        %1322 = vst [vmem:[%s220 + $0xc] sm:$0xf] %v1306
        %1323 = vst [vmem:[%s220 + $0x10] sm:$0xf] %v1307
        %1324 = vst [vmem:[%s220 + $0x14] sm:$0xf] %v1308
        %1325 = vst [vmem:[%s220 + $0x18] sm:$0xf] %v1309
        %1326 = vst [vmem:[%s220 + $0x1c] sm:$0xf] %v1310
        %1327 = vst [vmem:[%s220 + $0x20] sm:$0xf] %v1311
        %1328 = vst [vmem:[%s220 + $0x24] sm:$0xf] %v1312
        %1329 = vst [vmem:[%s220 + $0x28] sm:$0xf] %v1313
        %1330 = vst [vmem:[%s220 + $0x2c] sm:$0xf] %v1314
        %1331 = vst [vmem:[%s220 + $0x30] sm:$0xf] %v1315
        %1332 = vst [vmem:[%s220 + $0x34] sm:$0xf] %v1316
        %1333 = vst [vmem:[%s220 + $0x38] sm:$0xf] %v1317
        %1334 = vst [vmem:[%s220 + $0x3c] sm:$0xf] %v1318
        %s1335 = sand.u32 %s137, 1
        %s1336 = scalar_lea.sflag [#allocation3], %s1335
        %s1337 = sand.u32 %s137, 1
        %s1338 = smul.addr %s1337, 64
        %s1339 = scalar_lea.vmem [#allocation2], %s1338
        // Predicated region
        $region41: #{tpu_custom_call.1} parent=39 // pred_check
          %p1340 = pneg %p147
        $region42: #{tpu_custom_call.1} parent=39 // pred_check_branch
          %1342 = sbr.rel (%p1340) target = $region44
        $region43: #{tpu_custom_call.1} parent=39 // pred_region
          %s1343 = smul.u32 16, %s19
          %1345 = vsyncadd %s1336, 0
          %s1346 = smul.addr %s1343, 4
          %s1347 = scalar_lea.hbm %s5, %s1346
          %s1348 = sshll.u32 %s1339, 4
          %s1349 = int_to_ptr.vmem [resolvable:$true] %s1348
          %s1350 = sshll.u32 %s1347, 4
          %s1351 = int_to_ptr.hbm [resolvable:$true] %s1350
          %1356 = dma.vmem_to_hbm [thread:$0]  %s1349, 1024, %s1351, %s1336, 64, 64, 4
        $region44: #{tpu_custom_call.1} parent=39 // pred_fallthru
          _
      $region40: #{tpu_custom_call.1} parent=5 // pred_fallthru
        _
      %p1357 = scmp.le.s32.totalorder 2, %s14
      // Predicated region
      $region45: #{tpu_custom_call.1} parent=5 // pred_check
        %p1358 = pneg %p1357
      $region46: #{tpu_custom_call.1} parent=5 // pred_check_branch
        %1360 = sbr.rel (%p1358) target = $region48
      $region47: #{tpu_custom_call.1} parent=5 // pred_region
        %s1361 = ssub.s32 %s14, 2
        // Predicated region
        $region49: #{tpu_custom_call.1} parent=47 // pred_check
          %p1362 = pneg %p153
        $region50: #{tpu_custom_call.1} parent=47 // pred_check_branch
          %1364 = sbr.rel (%p1362) target = $region52
        $region51: #{tpu_custom_call.1} parent=47 // pred_region
          %s1365 = sand.u32 %s138, 1
          %s1366 = scalar_lea.sflag [#allocation3], %s1365
          %s1367 = sand.u32 %s138, 1
          %s1368 = smul.addr %s1367, 64
          %s1369 = scalar_lea.vmem [#allocation2], %s1368
          %1371 = dma.done %s1366, 1024
        $region52: #{tpu_custom_call.1} parent=47 // pred_fallthru
          _
      $region48: #{tpu_custom_call.1} parent=5 // pred_fallthru
        _
    $region6: #{tpu_custom_call.1} parent=1 // loop_footer
      %s18 = sadd.s32 1, %s14
    $region7: #{tpu_custom_call.1} parent=1 // loop_footer_branch
      %13 = sbr.rel target = $region3
    $region8: #{tpu_custom_call.1} parent=1 // loop_exit
      _
    %1372 = vsyncpa [#allocation3], 1
    %s1373 = scalar_lea.sflag [#allocation3], 1
    %1374 = vsyncpa %s1373, 1

</llo_original>
